<compile_context>
chip_gen: v7x
topology: tpu7x:2x2x1
jax: 0.10.0
libtpu: 0.0.40
codegen_flags: <defaults>
</compile_context>

<pallas_src>
import math

import jax
import jax.numpy as jnp
from jax.experimental import pallas as pl
from jax.experimental.pallas import tpu as pltpu


def _copy_kernel(x_ref, o_ref):
    # Identity pass-through for the current (rows, lanes) tile; the reshape
    # semantics themselves are metadata handled in the wrapper.
    o_ref[...] = x_ref[...]


def _sublane_multiple(itemsize: int) -> int:
    """Minimum second-minor extent for a fully packed vreg tile:
    8 rows for 32-bit, 16 for 16-bit, 32 for 8-bit dtypes."""
    return max(8, 32 // max(itemsize, 1))


def _choose_slab(total: int, sub_mult: int):
    """Pick (R, L) with R * L == total and L % 128 == 0.

    Prefers the widest lane extent (L up to 128*128 = 16384) for which the
    row count R is a multiple of `sub_mult` (fully packed sublanes).  Returns
    None if total is not a multiple of 128.
    """
    if total % 128 != 0:
        return None
    n = total // 128
    fallback = None
    for c in range(min(n, 128), 0, -1):
        if n % c:
            continue
        r = n // c
        if r % sub_mult == 0:
            return r, 128 * c
        if fallback is None:
            fallback = (r, 128 * c)  # widest lanes, rows not sublane-packed
    return fallback


def _choose_row_tile(R: int, L: int, itemsize: int, sub_mult: int,
                     target_bytes: int) -> int:
    """Largest row tile tr that divides R, is a multiple of sub_mult, and
    keeps the block at roughly target_bytes."""
    row_bytes = L * itemsize
    max_rows = max(sub_mult,
                   (target_bytes // row_bytes) // sub_mult * sub_mult)
    m = R // sub_mult
    best = sub_mult
    d = 1
    while d * d <= m:
        if m % d == 0:
            for cand in (d, m // d):
                t = sub_mult * cand
                if max_rows >= t > best:
                    best = t
        d += 1
    return min(best, R)


def view_module(x: jnp.ndarray, d_out: tuple[int, ...]) -> jnp.ndarray:
    """Pallas-free equivalent of ViewModule(d_out).forward(x).

    A reshape is metadata-only; launching a copy kernel would only add
    2x(total bytes) of HBM traffic for zero semantic work, so the default
    path short-circuits (top perf-review recommendation).
    """
    b = x.shape[0]
    in_flat = math.prod(x.shape[1:]) if x.ndim > 1 else 1
    out_flat = math.prod(d_out) if d_out else 1
    assert out_flat == in_flat, f"cannot view {x.shape} as {(b, *d_out)}"
    return x.reshape((b, *d_out))


def view_module_materialized(x: jnp.ndarray, d_out: tuple[int, ...], *,
                             donate: bool = False,
                             min_copy_bytes: int = 1 << 20) -> jnp.ndarray:
    """ViewModule forward that materializes a fresh output buffer via a
    Pallas identity-copy kernel (for callers that explicitly need a copy)."""
    b = x.shape[0]
    in_flat = math.prod(x.shape[1:]) if x.ndim > 1 else 1
    out_flat = math.prod(d_out) if d_out else 1
    assert out_flat == in_flat, f"cannot view {x.shape} as {(b, *d_out)}"

    out_shape = (b, *d_out)
    total = b * in_flat
    itemsize = jnp.dtype(x.dtype).itemsize
    nbytes = total * itemsize

    # Small tensors: fixed kernel-launch/DMA-setup overhead dwarfs the copy.
    if nbytes < min_copy_bytes:
        return x.reshape(out_shape)

    sub_mult = _sublane_multiple(itemsize)
    slab = _choose_slab(total, sub_mult)
    if slab is None or slab[0] % sub_mult != 0:
        # No lane/sublane-dense factorization: skip the copy kernel rather
        # than emit masked partial-tile stores or a full-extent VMEM block.
        return x.reshape(out_shape)

    R, L = slab
    # ~6 MiB blocks; double-buffered in+out => <=24 MiB pipelined VMEM,
    # within the 32 MiB limit and well under v7x's 64 MiB physical VMEM.
    tr = _choose_row_tile(R, L, itemsize, sub_mult, target_bytes=6 << 20)

    # Guarantee >=2 grid steps when possible so both v7x TensorCores share
    # the copy under "parallel" dimension semantics.
    if R // tr < 2:
        m = R // sub_mult
        if m >= 2:
            p = 2
            while p * p <= m and m % p:
                p += 1
            if m % p:
                p = m  # m is prime
            tr = sub_mult * (m // p)

    grid = (R // tr,)
    x2d = x.reshape(R, L)  # metadata-only: lane/sublane-dense slab

    extra = {}
    if donate:
        # Safe because in/out index maps are identical per grid step; only
        # request donation when the caller will not reuse x afterwards.
        extra["input_output_aliases"] = {0: 0}

    y2d = pl.pallas_call(
        _copy_kernel,
        out_shape=jax.ShapeDtypeStruct((R, L), x.dtype),
        grid_spec=pltpu.PrefetchScalarGridSpec(
            num_scalar_prefetch=0,
            grid=grid,
            in_specs=[pl.BlockSpec((tr, L), lambda i: (i, 0))],
            out_specs=pl.BlockSpec((tr, L), lambda i: (i, 0)),
        ),
        compiler_params=pltpu.CompilerParams(
            dimension_semantics=("parallel",),
            vmem_limit_bytes=32 << 20,
        ),
        cost_estimate=pl.CostEstimate(
            flops=0, transcendentals=0, bytes_accessed=2 * nbytes),
        **extra,
    )(x2d)

    return y2d.reshape(out_shape)  # metadata-only target view


if __name__ == "__main__":
    key = jax.random.PRNGKey(0)

    # Small NCHW input consistent with the module: batch=2, channels=4, 16x16.
    x = jax.random.normal(key, (2, 4, 16, 16), dtype=jnp.float32)
    d_out = (4, 256)  # ViewModule(d_out=[4, 256]): (2, 4, 16, 16) -> (2, 4, 256)

    ref = x.reshape((x.shape[0], *d_out))

    # Default path: metadata-only reshape (no kernel, no HBM traffic).
    y = jax.block_until_ready(view_module(x, d_out))
    assert y.shape == (2, 4, 256), y.shape
    assert y.dtype == x.dtype
    assert jnp.array_equal(y, ref), "mismatch vs reference reshape (default)"

    # Explicit materializing path: run the Pallas copy kernel once
    # (min_copy_bytes=0 disables the small-size early exit for the demo).
    y_mat = jax.block_until_ready(
        view_module_materialized(x, d_out, min_copy_bytes=0))
    assert y_mat.shape == (2, 4, 256), y_mat.shape
    assert y_mat.dtype == x.dtype
    assert jnp.array_equal(y_mat, ref), "mismatch vs reference reshape (copy)"

    # Non-128-divisible element count -> metadata-only fallback.
    x_odd = jax.random.normal(key, (2, 3, 10, 10), dtype=jnp.float32)
    y_odd = jax.block_until_ready(
        view_module_materialized(x_odd, (3, 100), min_copy_bytes=0))
    assert jnp.array_equal(y_odd, x_odd.reshape((2, 3, 100)))

    print("KERNEL_OK")
</pallas_src>

<mosaic_0001>
module attributes {stable_mosaic.version = 11 : i64} {
  func.func @_copy_kernel(%arg0: i32, %arg1: memref<8x256xf32, #tpu.memory_space<vmem>>, %arg2: memref<8x256xf32, #tpu.memory_space<vmem>>) attributes {dimension_semantics = [#tpu.dimension_semantics<parallel>], iteration_bounds = array<i64: 1>, scalar_prefetch = 0 : i64, scratch_operands = 0 : i64, tpu.core_type = #tpu.core_type<tc>, window_params = [{transform_indices = @transform_0, window_bounds = array<i64: 8, 256>}, {transform_indices = @transform_1, window_bounds = array<i64: 8, 256>}]} {
    %c0 = arith.constant 0 : index
    %c0_0 = arith.constant 0 : index
    %0 = vector.load %arg1[%c0, %c0_0] : memref<8x256xf32, #tpu.memory_space<vmem>>, vector<8x256xf32>
    %c0_1 = arith.constant 0 : index
    %c0_2 = arith.constant 0 : index
    %1 = vector.load %arg2[%c0_1, %c0_2] : memref<8x256xf32, #tpu.memory_space<vmem>>, vector<8x256xf32>
    tpu.vector_store %arg2[%c0_1, %c0_2], %0 {strides = array<i32>} : memref<8x256xf32, #tpu.memory_space<vmem>>, vector<8x256xf32>,
    return
  }
  func.func @transform_0(%arg0: i32) -> (i32, i32) {
    %c0_i32 = arith.constant 0 : i32
    %c0_i32_0 = arith.constant 0 : i32
    return %arg0, %c0_i32 : i32, i32
  }
  func.func @transform_1(%arg0: i32) -> (i32, i32) {
    %c0_i32 = arith.constant 0 : i32
    %c0_i32_0 = arith.constant 0 : i32
    return %arg0, %c0_i32 : i32, i32
  }
}

</mosaic_0001>

<llo_original>
// kernel: tpu_custom_call.1
$region0: #{tpu_custom_call.1}
  #allocation0 [shape = 'u32[]', space=smem, size = 0x4, offset = 0x4, fixed_abs, tag = 'smem constant byte address 0x4 - core index']
  #allocation1 [shape = 'u32[144,128]{1,0:T(1,128)}', space=vmem, size = 0x12000, scoped, tag = 'internal scratch']
  %s0 = inlined_call_operand.hbm [shape: f32[8,256], index: 0, kind: input, shape index: {}]
  %s1 = inlined_call_operand.hbm [shape: f32[8,256], index: 1, kind: output, shape index: {}]
  %s2 = sld [smem:[#allocation0]]
  $region18: #{tpu_custom_call.1} parent=0
    _
  %s4 = ssub.s32 1, %s2
  %s5 = scalar_select 0, %s4, %s2
  $region1: #{tpu_custom_call.1} parent=0
    #allocation2 [shape = 'u8[8192]{0}', space=vmem, size = 0x2000, scoped, tag = 'input window, operand 0, single buffered']
    #allocation3 [shape = 's32[1]{0}', space=sflag, size = 0x4, scoped, tag = 'scoped memory for tpu_custom_call.1']
    #allocation4 [shape = 's32[1]{0}', space=sflag, size = 0x4, scoped, tag = 'scoped memory for tpu_custom_call.1']
    #allocation5 [shape = 'u8[8192]{0}', space=vmem, size = 0x2000, scoped, tag = 'output window, operand 0, single buffered']
    %6 = vsyncpa [#allocation3], 0
    %7 = vsyncpa [#allocation4], 0
    // Predicated region
    $region2: #{tpu_custom_call.1} parent=1 // pred_check
      _
    $region3: #{tpu_custom_call.1} parent=1 // pred_check_branch
      %9 = sbr.rel (0) target = $region5
    $region4: #{tpu_custom_call.1} parent=1 // pred_region
      %s11 = ssub.s32 256, 256
      %12 = vsyncadd [#allocation3], %s11
      %s14 = sshll.u32 [#allocation2], 4
      %s15 = int_to_ptr.vmem [resolvable:$true] %s14
      %17 = dma.hbm_to_vmem [thread:$0]  %s0, 256, %s15, [#allocation3]
    $region5: #{tpu_custom_call.1} parent=1 // pred_fallthru
      _
    // Predicated region
    $region6: #{tpu_custom_call.1} parent=1 // pred_check
      _
    $region7: #{tpu_custom_call.1} parent=1 // pred_check_branch
      %19 = sbr.rel (0) target = $region9
    $region8: #{tpu_custom_call.1} parent=1 // pred_region
      %20 = dma.done [#allocation3], 256
    $region9: #{tpu_custom_call.1} parent=1 // pred_fallthru
      _
    %v21 = vld [vmem:[#allocation2] sm:$0xff]
    %v22 = vld [vmem:[#allocation2 + $0x8] sm:$0xff]
    %23 = vst [vmem:[#allocation5] sm:$0xff] %v21
    %24 = vst [vmem:[#allocation5 + $0x8] sm:$0xff] %v22
    // Predicated region
    $region10: #{tpu_custom_call.1} parent=1 // pred_check
      _
    $region11: #{tpu_custom_call.1} parent=1 // pred_check_branch
      %26 = sbr.rel (0) target = $region13
    $region12: #{tpu_custom_call.1} parent=1 // pred_region
      %s28 = ssub.s32 256, 256
      %29 = vsyncadd [#allocation4], %s28
      %s31 = sshll.u32 [#allocation5], 4
      %s32 = int_to_ptr.vmem [resolvable:$true] %s31
      %34 = dma.vmem_to_hbm [thread:$0]  %s32, 256, %s1, [#allocation4]
    $region13: #{tpu_custom_call.1} parent=1 // pred_fallthru
      _
    // Predicated region
    $region14: #{tpu_custom_call.1} parent=1 // pred_check
      _
    $region15: #{tpu_custom_call.1} parent=1 // pred_check_branch
      %36 = sbr.rel (0) target = $region17
    $region16: #{tpu_custom_call.1} parent=1 // pred_region
      %37 = dma.done [#allocation4], 256
    $region17: #{tpu_custom_call.1} parent=1 // pred_fallthru
      _
    %38 = vsyncpa [#allocation3], 1
    %39 = vsyncpa [#allocation4], 1

</llo_original>
